<compile_context>
chip_gen: v7x
topology: tpu7x:2x2x1
jax: 0.10.0
libtpu: 0.0.40
codegen_flags: <defaults>
</compile_context>

<pallas_src>
import numpy as np
import jax
import jax.numpy as jnp
from jax.experimental import pallas as pl
from jax.experimental.pallas import tpu as pltpu


def _round_up(x, m):
    return ((x + m - 1) // m) * m


def _patch_embed_kernel(xT_ref, w_ref, b_ref, o_ref):
    # xT_ref: (K, tn)  bf16 patches tile (K = C*pd*ph*pw, tn = M tile on lanes)
    # w_ref:  (E, K)   bf16 flattened conv weight (resident across grid steps)
    # b_ref:  (E, 1)   f32 bias
    # o_ref:  (E, tn)  f32 embedded patches tile -> lane-dense stores
    acc = jnp.dot(w_ref[...], xT_ref[...], preferred_element_type=jnp.float32)
    o_ref[...] = (acc + b_ref[...]).astype(o_ref.dtype)


def _choose_m_tile(M, K, E, *, lane=128, tn_cap=2048, vmem_budget=16 << 20):
    """Pick the lane-axis (M) tile: as large as possible within a VMEM budget."""
    # Bytes of VMEM per output-lane column: double-buffered bf16 input column
    # (2*K bytes each) + double-buffered f32 output column (4*E bytes each).
    per_lane = 2 * (2 * K) + 2 * (4 * E)
    cap = (vmem_budget // max(per_lane, 1)) // lane * lane
    cap = max(lane, min(tn_cap, cap))
    if M <= cap:
        # Single block, full extent: always a legal block shape, one grid step
        # (no per-step overhead multiplication for tiny problems).
        return M
    # Balanced cdiv tiles, lane-aligned; Pallas masks the ragged tail block.
    n = pl.cdiv(M, cap)
    return _round_up(pl.cdiv(M, n), lane)


def patch_embed_matmul(patchesT, weight2d, bias, *, tn_cap=2048):
    """patchesT: (K, M), weight2d: (E, K), bias: (E,) -> (E, M) float32."""
    K, M = patchesT.shape
    E, _ = weight2d.shape

    # MXU operands in bf16; accumulation / bias add / stored output stay f32.
    patchesT = patchesT.astype(jnp.bfloat16)
    weight2d = weight2d.astype(jnp.bfloat16)
    bias2d = bias.reshape(E, 1).astype(jnp.float32)

    tn = _choose_m_tile(M, K, E, tn_cap=tn_cap)
    grid = pl.cdiv(M, tn)

    cost = pl.CostEstimate(
        flops=2 * M * K * E,
        transcendentals=0,
        bytes_accessed=2 * M * K + 2 * K * E + 4 * M * E + 4 * E,
    )

    return pl.pallas_call(
        _patch_embed_kernel,
        out_shape=jax.ShapeDtypeStruct((E, M), jnp.float32),
        grid_spec=pltpu.PrefetchScalarGridSpec(
            num_scalar_prefetch=0,
            grid=(grid,),
            in_specs=[
                pl.BlockSpec((K, tn), lambda i: (0, i)),
                pl.BlockSpec((E, K), lambda i: (0, 0)),
                pl.BlockSpec((E, 1), lambda i: (0, 0)),
            ],
            out_specs=pl.BlockSpec((E, tn), lambda i: (0, i)),
        ),
        compiler_params=pltpu.CompilerParams(
            dimension_semantics=("parallel",),
            # Allow XLA to fuse the im2col transpose / bf16 cast that produces
            # `patchesT` into the kernel's input DMA instead of materializing
            # it as a separate HBM round trip.
            allow_input_fusion=[True, False, False],
        ),
        cost_estimate=cost,
    )(patchesT, weight2d, bias2d)


class PatchEmbedPallas:
    """JAX/Pallas re-implementation of the PyTorch PatchEmbed module."""

    def __init__(self, img_size=(8, 8, 8, 4), patch_size=(4, 4, 4),
                 in_chans=1, embed_dim=32, key=None):
        self.img_size = img_size
        self.patch_size = patch_size
        self.patches_resolution = [img_size[i] // patch_size[i] for i in range(3)]
        self.num_patches = int(np.prod(self.patches_resolution)) * img_size[3]
        self.in_chans = in_chans
        self.embed_dim = embed_dim
        if key is None:
            key = jax.random.PRNGKey(0)
        kw, kb = jax.random.split(key)
        # Conv3d(in_chans, embed_dim, kernel_size=patch_size, stride=patch_size)
        # weight: (embed_dim, in_chans, pd, ph, pw), bias: (embed_dim,)
        self.weight = (jax.random.normal(
            kw, (embed_dim, in_chans) + tuple(patch_size), jnp.float32) * 0.02)
        self.bias = (jax.random.normal(kb, (embed_dim,), jnp.float32) * 0.02)
        # TODO(synk): norm_layer (e.g. LayerNorm) not instantiated, matching
        # PatchEmbed's default norm_layer=None.

    def __call__(self, x):
        B, C, D, H, W, T = x.shape
        assert (D, H, W) == tuple(self.img_size[:3]), \
            "Input spatial dimensions don't match model."
        assert T == self.img_size[3], "Input temporal dimension does not match."

        pd, ph, pw = self.patch_size
        Dp, Hp, Wp = D // pd, H // ph, W // pw
        Np = Dp * Hp * Wp
        E = self.embed_dim
        K = C * pd * ph * pw
        BT = B * T

        # Mirror torch `x.view(B*T, C, D, H, W)` (raw row-major reinterpretation
        # of the contiguous NCDHWT tensor, exactly what the PyTorch module does).
        xv = x.reshape(BT, C, D, H, W)

        # im2col with the patch axes (C, pd, ph, pw) leading so the kernel RHS is
        # (K, M): lane-dense input loads and a lane-dense (E, tn) output.
        # TODO(synk): if the HLO shows this transpose materialized for large
        # configs (allow_input_fusion not taken), move the im2col into the
        # kernel (BlockSpec over a bt/Dp slab + in-VMEM relayout) to save a
        # full HBM round trip of the activations.
        xp = xv.reshape(BT, C, Dp, pd, Hp, ph, Wp, pw)
        patchesT = jnp.transpose(xp, (1, 3, 5, 7, 0, 2, 4, 6)).reshape(K, BT * Np)

        # Flatten conv weight to (E, K); conv = W2d @ patchesT + b.
        w2d = self.weight.reshape(E, K)

        yT = patch_embed_matmul(patchesT, w2d, self.bias)  # (E, M) = (E, B*T*Np)

        # torch: conv (BT,E,Dp,Hp,Wp) -> view (B,T,E,Np) -> permute(0,2,3,1) -> (B,E,Np,T)
        # here:  (E, B*T*Np) -> (E, B, T, Np) -> (B, E, Np, T)
        # TODO(synk): a fused downstream consumer could take the lane-dense
        # (E, B*T*Np) intermediate directly and skip this permute (the
        # (B,E,Np,T) target has T=4 last, which is lane-hostile to write directly).
        y = yT.reshape(E, B, T, Np)
        y = jnp.transpose(y, (1, 0, 3, 2))
        return y


def _reference_forward(module, x, operand_dtype=jnp.float32):
    """Pure-jnp reference of the PyTorch forward (for correctness check)."""
    B, C, D, H, W, T = x.shape
    pd, ph, pw = module.patch_size
    Dp, Hp, Wp = D // pd, H // ph, W // pw
    Np = Dp * Hp * Wp
    E = module.embed_dim
    xv = x.reshape(B * T, C, D, H, W)
    xp = xv.reshape(B * T, C, Dp, pd, Hp, ph, Wp, pw)
    xp = jnp.transpose(xp, (0, 2, 4, 6, 1, 3, 5, 7)).reshape(B * T, Np, -1)
    w2d = module.weight.reshape(E, -1)
    conv = jnp.einsum('mnk,ek->mne',
                      xp.astype(operand_dtype), w2d.astype(operand_dtype),
                      preferred_element_type=jnp.float32) + module.bias
    y = jnp.transpose(conv, (0, 2, 1)).reshape(B, T, E, Np)   # (B, T, E, Np)
    y = jnp.transpose(y, (0, 2, 3, 1))                        # (B, E, Np, T)
    return y


if __name__ == "__main__":
    key = jax.random.PRNGKey(0)
    k_param, k_x, k_param2, k_x2 = jax.random.split(key, 4)

    # --- Test 1: tiny config (single grid step, everything resident in VMEM) ---
    img_size = (8, 8, 8, 4)
    patch_size = (4, 4, 4)
    in_chans = 1
    embed_dim = 32
    B = 2

    module = PatchEmbedPallas(img_size=img_size, patch_size=patch_size,
                              in_chans=in_chans, embed_dim=embed_dim, key=k_param)
    x = jax.random.normal(
        k_x, (B, in_chans) + img_size[:3] + (img_size[3],), jnp.float32)

    out = jax.block_until_ready(module(x))

    # Tight check vs. a reference using the same bf16 matmul operands
    # (f32 accumulation), and a loose check vs. full-f32 math.
    ref_bf16 = _reference_forward(module, x, operand_dtype=jnp.bfloat16)
    np.testing.assert_allclose(np.asarray(out), np.asarray(ref_bf16),
                               rtol=2e-3, atol=2e-3)
    ref_f32 = _reference_forward(module, x, operand_dtype=jnp.float32)
    np.testing.assert_allclose(np.asarray(out), np.asarray(ref_f32),
                               rtol=5e-2, atol=2e-2)
    Np = int(np.prod(module.patches_resolution))
    assert out.shape == (B, embed_dim, Np, img_size[3]), out.shape

    # --- Test 2: larger config exercising a multi-step grid and a ragged tail ---
    img_size2 = (24, 24, 24, 20)   # M = 20 * 6*6*6 = 4320 -> 3 grid steps of 1536
    B2 = 1
    module2 = PatchEmbedPallas(img_size=img_size2, patch_size=patch_size,
                               in_chans=in_chans, embed_dim=embed_dim, key=k_param2)
    x2 = jax.random.normal(
        k_x2, (B2, in_chans) + img_size2[:3] + (img_size2[3],), jnp.float32)

    out2 = jax.block_until_ready(module2(x2))
    ref2_bf16 = _reference_forward(module2, x2, operand_dtype=jnp.bfloat16)
    np.testing.assert_allclose(np.asarray(out2), np.asarray(ref2_bf16),
                               rtol=2e-3, atol=2e-3)
    Np2 = int(np.prod(module2.patches_resolution))
    assert out2.shape == (B2, embed_dim, Np2, img_size2[3]), out2.shape

    print("KERNEL_OK")
</pallas_src>

<mosaic_0001>
module attributes {stable_mosaic.version = 11 : i64} {
  func.func @_patch_embed_kernel(%arg0: i32, %arg1: memref<64x64xbf16, #tpu.memory_space<vmem>>, %arg2: memref<32x64xbf16, #tpu.memory_space<vmem>>, %arg3: memref<32x1xf32, #tpu.memory_space<vmem>>, %arg4: memref<32x64xf32, #tpu.memory_space<vmem>>) attributes {dimension_semantics = [#tpu.dimension_semantics<parallel>], iteration_bounds = array<i64: 1>, scalar_prefetch = 0 : i64, scratch_operands = 0 : i64, tpu.core_type = #tpu.core_type<tc>, window_params = [{transform_indices = @transform_0, window_bounds = array<i64: 64, 64>}, {pipeline_mode = #tpu.pipeline_mode<synchronous>, transform_indices = @transform_1, window_bounds = array<i64: 32, 64>}, {pipeline_mode = #tpu.pipeline_mode<synchronous>, transform_indices = @transform_2, window_bounds = array<i64: 32, 1>}, {transform_indices = @transform_3, window_bounds = array<i64: 32, 64>}]} {
    %c0 = arith.constant 0 : index
    %c0_0 = arith.constant 0 : index
    %0 = vector.load %arg2[%c0, %c0_0] : memref<32x64xbf16, #tpu.memory_space<vmem>>, vector<32x64xbf16>
    %c0_1 = arith.constant 0 : index
    %c0_2 = arith.constant 0 : index
    %1 = vector.load %arg1[%c0_1, %c0_2] : memref<64x64xbf16, #tpu.memory_space<vmem>>, vector<64x64xbf16>
    %cst = arith.constant dense<0.000000e+00> : vector<32x64xf32>
    %2 = tpu.matmul %0, %1, %cst {dimension_numbers = #tpu.dot_dimension_numbers<[1], [0], [0], [1], [0, 0, 1, 1], [], []>} : vector<32x64xbf16>, vector<64x64xbf16>, vector<32x64xf32> -> vector<32x64xf32>
    %c0_3 = arith.constant 0 : index
    %c0_4 = arith.constant 0 : index
    %3 = vector.load %arg3[%c0_3, %c0_4] : memref<32x1xf32, #tpu.memory_space<vmem>>, vector<32x1xf32>
    %4 = vector.broadcast %3 : vector<32x1xf32> to vector<32x64xf32>
    %5 = arith.addf %2, %4 : vector<32x64xf32>
    %c0_5 = arith.constant 0 : index
    %c0_6 = arith.constant 0 : index
    %6 = vector.load %arg4[%c0_5, %c0_6] : memref<32x64xf32, #tpu.memory_space<vmem>>, vector<32x64xf32>
    tpu.vector_store %arg4[%c0_5, %c0_6], %5 {strides = array<i32>} : memref<32x64xf32, #tpu.memory_space<vmem>>, vector<32x64xf32>,
    return
  }
  func.func @transform_0(%arg0: i32) -> (i32, i32) {
    %c0_i32 = arith.constant 0 : i32
    %c0_i32_0 = arith.constant 0 : i32
    return %c0_i32, %arg0 : i32, i32
  }
  func.func @transform_1(%arg0: i32) -> (i32, i32) {
    %c0_i32 = arith.constant 0 : i32
    %c0_i32_0 = arith.constant 0 : i32
    %c0_i32_1 = arith.constant 0 : i32
    return %c0_i32, %c0_i32_0 : i32, i32
  }
  func.func @transform_2(%arg0: i32) -> (i32, i32) {
    %c0_i32 = arith.constant 0 : i32
    %c0_i32_0 = arith.constant 0 : i32
    %c0_i32_1 = arith.constant 0 : i32
    return %c0_i32, %c0_i32_0 : i32, i32
  }
  func.func @transform_3(%arg0: i32) -> (i32, i32) {
    %c0_i32 = arith.constant 0 : i32
    %c0_i32_0 = arith.constant 0 : i32
    return %c0_i32, %arg0 : i32, i32
  }
}

</mosaic_0001>

<llo_original>
// kernel: tpu_custom_call.1
$region0: #{tpu_custom_call.1}
  #allocation0 [shape = 'u32[]', space=smem, size = 0x4, offset = 0x4, fixed_abs, tag = 'smem constant byte address 0x4 - core index']
  #allocation1 [shape = 'u32[144,128]{1,0:T(1,128)}', space=vmem, size = 0x12000, scoped, tag = 'internal scratch']
  %s0 = inlined_call_operand.vmem [shape: bf16[64,64], index: 0, kind: input, shape index: {}]
  %s1 = inlined_call_operand.hbm [shape: bf16[32,64], index: 1, kind: input, shape index: {}]
  %s2 = inlined_call_operand.vmem [shape: f32[32,1], index: 2, kind: input, shape index: {}]
  %s3 = inlined_call_operand.hbm [shape: f32[32,64], index: 3, kind: output, shape index: {}]
  %s4 = sld [smem:[#allocation0]]
  $region26: #{tpu_custom_call.1} parent=0
    _
  %s6 = ssub.s32 1, %s4
  %s7 = scalar_select 0, %s6, %s4
  $region1: #{tpu_custom_call.1} parent=0
    #allocation2 [shape = 'u8[8192]{0}', space=vmem, size = 0x2000, scoped, tag = 'input window, operand 1, single buffered']
    #allocation3 [shape = 's32[1]{0}', space=sflag, size = 0x4, scoped, tag = 'scoped memory for tpu_custom_call.1']
    #allocation4 [shape = 's32[1]{0}', space=sflag, size = 0x4, scoped, tag = 'scoped memory for tpu_custom_call.1']
    #allocation5 [shape = 'u8[16384]{0}', space=vmem, size = 0x4000, scoped, tag = 'output window, operand 0, single buffered']
    %8 = vsyncpa [#allocation3], 0
    %9 = vsyncpa [#allocation4], 0
    // Predicated region
    $region2: #{tpu_custom_call.1} parent=1 // pred_check
      _
    $region3: #{tpu_custom_call.1} parent=1 // pred_check_branch
      %11 = sbr.rel (0) target = $region5
    $region4: #{tpu_custom_call.1} parent=1 // pred_region
      _
    $region5: #{tpu_custom_call.1} parent=1 // pred_fallthru
      _
    // Predicated region
    $region6: #{tpu_custom_call.1} parent=1 // pred_check
      _
    $region7: #{tpu_custom_call.1} parent=1 // pred_check_branch
      %13 = sbr.rel (0) target = $region9
    $region8: #{tpu_custom_call.1} parent=1 // pred_region
      %s15 = ssub.s32 256, 256
      %16 = vsyncadd [#allocation3], %s15
      %s17 = sshll.u32 [#allocation2], 4
      %s18 = int_to_ptr.vmem [resolvable:$true] %s17
      %23 = dma.hbm_to_vmem [thread:$0]  %s1, 256, %s18, [#allocation3], 64, 64, 4
    $region9: #{tpu_custom_call.1} parent=1 // pred_fallthru
      _
    // Predicated region
    $region10: #{tpu_custom_call.1} parent=1 // pred_check
      _
    $region11: #{tpu_custom_call.1} parent=1 // pred_check_branch
      %25 = sbr.rel (0) target = $region13
    $region12: #{tpu_custom_call.1} parent=1 // pred_region
      _
    $region13: #{tpu_custom_call.1} parent=1 // pred_fallthru
      _
    // Predicated region
    $region14: #{tpu_custom_call.1} parent=1 // pred_check
      _
    $region15: #{tpu_custom_call.1} parent=1 // pred_check_branch
      %27 = sbr.rel (0) target = $region17
    $region16: #{tpu_custom_call.1} parent=1 // pred_region
      %28 = dma.done [#allocation3], 256
    $region17: #{tpu_custom_call.1} parent=1 // pred_fallthru
      _
    %v30 = vld [vmem:[#allocation2] sm:$0xf]
    %v31 = vld [vmem:[#allocation2 + $0x4] sm:$0xf]
    %v32 = vld [vmem:[#allocation2 + $0x8] sm:$0xf]
    %v33 = vld [vmem:[#allocation2 + $0xc] sm:$0xf]
    %v34 = vld [vmem:[%s0] sm:$0xf]
    %v35 = vld [vmem:[%s0 + $0x4] sm:$0xf]
    %v36 = vld [vmem:[%s0 + $0x8] sm:$0xf]
    %v37 = vld [vmem:[%s0 + $0xc] sm:$0xf]
    %v38 = vld [vmem:[%s0 + $0x10] sm:$0xf]
    %v39 = vld [vmem:[%s0 + $0x14] sm:$0xf]
    %v40 = vld [vmem:[%s0 + $0x18] sm:$0xf]
    %v41 = vld [vmem:[%s0 + $0x1c] sm:$0xf]
    %v42 = vld [vmem:[%s2] sm:$0xff]
    %v43 = vld [vmem:[%s2 + $0x8] sm:$0xff]
    %v44 = vld [vmem:[%s2 + $0x10] sm:$0xff]
    %v45 = vld [vmem:[%s2 + $0x18] sm:$0xff]
    %47 = vset.pattern.permute.xlu0 0
    %48 = vperm.xlu0 %47, %v42
    %v49 = vpop.permute.xlu0 %48
    %52 = vset.pattern.permute.xlu0 0
    %53 = vperm.xlu0 %52, %v43
    %v54 = vpop.permute.xlu0 %53
    %57 = vset.pattern.permute.xlu0 0
    %58 = vperm.xlu0 %57, %v44
    %v59 = vpop.permute.xlu0 %58
    %62 = vset.pattern.permute.xlu0 0
    %63 = vperm.xlu0 %62, %v45
    %v64 = vpop.permute.xlu0 %63
    %v70 = vunpack.c.l.b16 %v30
    %v71 = vunpack.c.l.b16 %v31
    %v72 = vunpack.c.l.b16 %v32
    %v73 = vunpack.c.l.b16 %v33
    %v74 = vpack.c.b16 %v71, %v70
    %v75 = vpack.c.b16 %v73, %v72
    %v84 = vunpack.c.l.b16 %v34
    %v85 = vunpack.c.l.b16 %v35
    %v86 = vunpack.c.l.b16 %v36
    %v87 = vunpack.c.l.b16 %v37
    %v88 = vunpack.c.l.b16 %v38
    %v89 = vunpack.c.l.b16 %v39
    %v90 = vunpack.c.l.b16 %v40
    %v91 = vunpack.c.l.b16 %v41
    %v92 = vpack.c.b16 %v85, %v84
    %v93 = vpack.c.b16 %v87, %v86
    %v94 = vpack.c.b16 %v89, %v88
    %v95 = vpack.c.b16 %v91, %v90
    %vm100 = vcmask 523264
    %v102 = vsel %vm100, %v74, 0
    %v105 = vsel %vm100, %v75, 0
    %107 = vmatprep.subr.bf16.mxu0 0
    %108 = vmatpush1.bf16.msra.mxu0 %v92
    %109 = vmatprep.subr.bf16.mxu0 0
    %110 = vmatpush1.bf16.msra.mxu0 %v93
    %111 = vmatprep.subr.bf16.mxu0 0
    %112 = vmatpush1.bf16.msra.mxu0 %v94
    %113 = vmatprep.subr.bf16.mxu0 0
    %114 = vmatpush1.bf16.msra.mxu0 %v95
    %115 = vmatprep.subr.bf16.mxu0 0
    %116 = vmatpush1.bf16.msra.mxu0 0
    %117 = vmatprep.subr.bf16.mxu0 0
    %118 = vmatpush1.bf16.msra.mxu0 0
    %119 = vmatprep.subr.bf16.mxu0 0
    %120 = vmatpush1.bf16.msra.mxu0 0
    %121 = vmatprep.subr.bf16.mxu0 0
    %122 = vmatpush1.bf16.msra.mxu0 0
    %123 = vmatprep.subr.bf16.mxu0 0
    %124 = vmatpush1.bf16.msra.mxu0 0
    %125 = vmatprep.subr.bf16.mxu0 0
    %126 = vmatpush1.bf16.msra.mxu0 0
    %127 = vmatprep.subr.bf16.mxu0 0
    %128 = vmatpush1.bf16.msra.mxu0 0
    %129 = vmatprep.subr.bf16.mxu0 0
    %130 = vmatpush1.bf16.msra.mxu0 0
    %131 = vmatprep.subr.bf16.mxu0 0
    %132 = vmatpush1.bf16.msra.mxu0 0
    %133 = vmatprep.subr.bf16.mxu0 0
    %134 = vmatpush1.bf16.msra.mxu0 0
    %135 = vmatprep.subr.bf16.mxu0 0
    %136 = vmatpush1.bf16.msra.mxu0 0
    %137 = vmatprep.subr.bf16.mxu0 0
    %138 = vmatpush1.bf16.msra.mxu0 0
    %139 = vmatprep.mubr.bf16.mxu0 0
    %140 = vmatmul.mubr.bf16.gmra.mrb[0].mxu0 %v102
    %v141 = vpop.f32.mrb[0].mxu0
    %v142 = vadd.f32 %v49, %v141
    %v143 = vpop.f32.mrb[0].mxu0
    %v144 = vpop.f32.mrb[0].mxu0
    %v145 = vadd.f32 %v54, %v144
    %v146 = vpop.f32.mrb[0].mxu0
    %147 = vmatprep.mubr.bf16.mxu0 0
    %148 = vmatmul.mubr.bf16.gmra.mrb[0].mxu0 %v105
    %v149 = vpop.f32.mrb[0].mxu0
    %v150 = vadd.f32 %v59, %v149
    %v151 = vpop.f32.mrb[0].mxu0
    %v152 = vpop.f32.mrb[0].mxu0
    %v153 = vadd.f32 %v64, %v152
    %v154 = vpop.f32.mrb[0].mxu0
    %155 = vdwg.mxu0
    %156 = vst.msk [vmem:[#allocation5] sm:$0xff] %vm100, %v142
    %157 = vst.msk [vmem:[#allocation5 + $0x8] sm:$0xff] %vm100, %v145
    %158 = vst.msk [vmem:[#allocation5 + $0x10] sm:$0xff] %vm100, %v150
    %159 = vst.msk [vmem:[#allocation5 + $0x18] sm:$0xff] %vm100, %v153
    // Predicated region
    $region18: #{tpu_custom_call.1} parent=1 // pred_check
      _
    $region19: #{tpu_custom_call.1} parent=1 // pred_check_branch
      %161 = sbr.rel (0) target = $region21
    $region20: #{tpu_custom_call.1} parent=1 // pred_region
      %s163 = ssub.s32 512, 512
      %164 = vsyncadd [#allocation4], %s163
      %s165 = sshll.u32 [#allocation5], 4
      %s166 = int_to_ptr.vmem [resolvable:$true] %s165
      %171 = dma.vmem_to_hbm [thread:$0]  %s166, 512, %s3, [#allocation4], 128, 128, 8
    $region21: #{tpu_custom_call.1} parent=1 // pred_fallthru
      _
    // Predicated region
    $region22: #{tpu_custom_call.1} parent=1 // pred_check
      _
    $region23: #{tpu_custom_call.1} parent=1 // pred_check_branch
      %173 = sbr.rel (0) target = $region25
    $region24: #{tpu_custom_call.1} parent=1 // pred_region
      %174 = dma.done [#allocation4], 512
    $region25: #{tpu_custom_call.1} parent=1 // pred_fallthru
      _
    %175 = vsyncpa [#allocation3], 1
    %176 = vsyncpa [#allocation4], 1

</llo_original>
